<compile_context>
chip_gen: v5e
topology: v5e:2x2
jax: 0.10.0
libtpu: 0.0.40
codegen_flags: <defaults>
</compile_context>

<pallas_src>
import numpy as np
import jax
import jax.numpy as jnp
from jax import lax
from jax.experimental import pallas as pl
from jax.experimental.pallas import tpu as pltpu


# --------------------------- host-side helpers --------------------------------
def _round_up(x: int, m: int) -> int:
    return ((x + m - 1) // m) * m


def _bilinear_matrix(out_size: int, in_size: int) -> np.ndarray:
    """(out_size, in_size) matrix implementing 1-D bilinear interpolation with
    half-pixel centers (align_corners=False), i.e. torchvision resize w/o antialias."""
    m = np.zeros((out_size, in_size), dtype=np.float32)
    if out_size == in_size:
        np.fill_diagonal(m, 1.0)
        return m
    scale = in_size / out_size
    for i in range(out_size):
        src = (i + 0.5) * scale - 0.5
        src = min(max(src, 0.0), in_size - 1.0)
        lo = int(np.floor(src))
        hi = min(lo + 1, in_size - 1)
        w = src - lo
        m[i, lo] += 1.0 - w
        m[i, hi] += w
    return m


def _resample_rgb_indices(n_frames: int, orig_fps: float, new_fps: float) -> np.ndarray:
    """torch: arange(0, orig_fps * duration_sec - 1e-9, orig_fps/new_fps).long()"""
    duration_sec = n_frames / orig_fps
    idx = np.arange(0.0, orig_fps * duration_sec - 1e-9, orig_fps / new_fps)
    return idx.astype(np.int32)


def _letterbox_matrices(H: int, W: int, new_h: int, new_w: int):
    """Returns (mh, mw) with mh (new_h, H), mw (new_w, W) such that
    mh @ img @ mw.T equals the resized and zero-letterboxed (new_h, new_w) image
    (pad folded in as zero rows/cols). Returns None when aspect ratios match
    (spec: frames are returned untouched). Uses Python round() exactly like the
    reference module."""
    target_ar = new_w / new_h
    current_ar = W / H
    if current_ar > target_ar:              # wide input -> letterbox (pad top/bottom)
        scaled_h = round(new_w / current_ar)
        top = (new_h - scaled_h) // 2
        mh = np.zeros((new_h, H), np.float32)
        mh[top:top + scaled_h] = _bilinear_matrix(scaled_h, H)
        mw = _bilinear_matrix(new_w, W)
    elif current_ar < target_ar:            # tall input -> pillarbox (pad left/right)
        scaled_w = round(new_h * current_ar)
        left = (new_w - scaled_w) // 2
        mh = _bilinear_matrix(new_h, H)
        mw = np.zeros((new_w, W), np.float32)
        mw[left:left + scaled_w] = _bilinear_matrix(scaled_w, W)
    else:
        return None
    return mh, mw


def _reference_resize_pad(frames: np.ndarray, new_h: int, new_w: int) -> np.ndarray:
    """Pure-numpy reference (logical-size matrices, f32/f64 math)."""
    _, _, H, W = frames.shape
    mats = _letterbox_matrices(H, W, new_h, new_w)
    if mats is None:
        return frames
    mh, mw = mats
    t = np.einsum('oh,tchw->tcow', mh, frames.astype(np.float64))
    return np.einsum('tcow,nw->tcon', t, mw).astype(np.float32)


# --------------------- fused Pallas kernel: gather+resize+pad ------------------
def _batched_dot(a, b):
    """(B, M, K) x (B, K, N) -> (B, M, N), f32 accumulation on the MXU."""
    return lax.dot_general(a, b, dimension_numbers=(((2,), (1,)), ((0,), (0,))),
                           preferred_element_type=jnp.float32)


def _make_resize_kernel(F: int, C: int, H: int, W: int, PH: int, PW: int, w_first: bool):
    B = F * C

    def kernel(idx_ref, *refs):
        del idx_ref                              # consumed by the gather index_map only
        frame_refs = refs[:F]
        ph_ref, pwt_ref, o_ref = refs[F], refs[F + 1], refs[F + 2]

        ph = ph_ref[...]                         # (PH, H)  bf16, pad rows already zero
        pwt = pwt_ref[...]                       # (W, PW)  bf16, pad cols already zero

        # Widen the frames only after the DMA (uint8/bf16/f32 all fine in HBM).
        frames = [r[0].astype(jnp.bfloat16) for r in frame_refs]      # each (C, H, W)
        x = frames[0] if F == 1 else jnp.concatenate(frames, axis=0)  # (B, H, W)

        ph_b = jnp.broadcast_to(ph[None], (B, PH, H))                 # tiny bf16 bcast

        if w_first:
            # One big matmul: (B*H, W) @ (W, PW) -> (B*H, PW); then batched H-contract.
            t = jnp.dot(x.reshape(B * H, W), pwt,
                        preferred_element_type=jnp.float32)           # (B*H, PW)
            t = t.reshape(B, H, PW).astype(jnp.bfloat16)
            out = _batched_dot(ph_b, t)                               # (B, PH, PW)
        else:
            # Batched H-contract first, then one big (B*PH, W) @ (W, PW) matmul.
            t = _batched_dot(ph_b, x)                                 # (B, PH, W)
            t = t.reshape(B * PH, W).astype(jnp.bfloat16)
            out = jnp.dot(t, pwt,
                          preferred_element_type=jnp.float32)         # (B*PH, PW)
            out = out.reshape(B, PH, PW)

        o_ref[...] = out.reshape(F, C, PH, PW).astype(o_ref.dtype)    # dense slab store

    return kernel


def fused_resample_resize_pad(video, frame_idx, mh, mw, new_h, new_w):
    """video: (T, C, H, W) any dtype; frame_idx: (T_out,) int; mh: (new_h, H); mw: (new_w, W).
    Returns float32 (T_out, C, new_h, new_w) = resize + letterbox-pad of video[frame_idx]."""
    T, C, H, W = video.shape
    T_out = int(frame_idx.shape[0])
    in_itemsize = jnp.dtype(video.dtype).itemsize

    # Lane/sublane-dense output slab; the extra rows/cols are zero and sliced off after.
    PH = _round_up(new_h, 8)
    PW = _round_up(new_w, 128)
    ph = np.zeros((PH, H), np.float32)
    ph[:new_h] = mh
    pwt = np.zeros((W, PW), np.float32)
    pwt[:, :new_w] = mw.T

    # Frames per grid step: amortize per-step overhead / DMA setup for small frames.
    frame_bytes = C * H * W * in_itemsize
    if frame_bytes >= (1 << 20):
        F = 1
    else:
        F = max(1, min(T_out, 8, (1 << 20) // frame_bytes))
    T_pad = _round_up(T_out, F)
    idx = np.asarray(frame_idx, dtype=np.int32)
    if T_pad > T_out:
        idx = np.concatenate([idx, np.full(T_pad - T_out, idx[-1], np.int32)])

    # Cheaper contraction order (per-frame MACs).
    cost_w_first = C * H * PW * (W + PH)
    cost_h_first = C * PH * W * (H + PW)
    w_first = cost_w_first <= cost_h_first
    macs = min(cost_w_first, cost_h_first)

    # VMEM budget: double-buffered frame + output blocks, matrices, intermediates.
    vmem_needed = (
        2 * F * frame_bytes                              # gathered frame blocks (x2 buf)
        + 2 * F * C * PH * PW * 4                        # output block f32 (x2 buf)
        + 2 * (PH * H + W * PW) * 2                      # bf16 interp matrices
        + F * C * (H * W * 2 + PH * H * 2                # bf16 frame copy + ph broadcast
                   + max(H * PW, PH * W) * 4             # f32 intermediate
                   + PH * PW * 4))                       # f32 result
    vmem_limit = int(min(max(int(vmem_needed * 1.5) + (2 << 20), 32 << 20), 48 << 20))
    # TODO(synk): for >=1080p f32 frames on v7x (64 MiB VMEM) this working set overflows;
    # chunk the contraction dim with a f32 VMEM accumulator + pl.when init/finalize.

    flops = int(2 * macs * T_pad)
    bytes_accessed = int(T_pad * frame_bytes                 # gathered input frames
                         + T_pad * C * PH * PW * 4           # output slabs
                         + (ph.size + pwt.size) * 2)         # matrices: fetched once per core

    video_specs = [
        pl.BlockSpec((1, C, H, W),
                     lambda t, idx_ref, f=f: (idx_ref[t * F + f], 0, 0, 0))
        for f in range(F)
    ]
    # TODO(synk): if still DMA-exposed on v5e after dtype shrinking, try
    # pipeline_mode=pl.Buffered(3) on the video specs (skip on v7x).
    grid_spec = pltpu.PrefetchScalarGridSpec(
        num_scalar_prefetch=1,
        grid=(T_pad // F,),
        in_specs=video_specs + [
            pl.BlockSpec((PH, H), lambda t, idx_ref: (0, 0)),
            pl.BlockSpec((W, PW), lambda t, idx_ref: (0, 0)),
        ],
        out_specs=pl.BlockSpec((F, C, PH, PW), lambda t, idx_ref: (t, 0, 0, 0)),
    )

    out = pl.pallas_call(
        _make_resize_kernel(F, C, H, W, PH, PW, w_first),
        grid_spec=grid_spec,
        out_shape=jax.ShapeDtypeStruct((T_pad, C, PH, PW), jnp.float32),
        compiler_params=pltpu.CompilerParams(
            dimension_semantics=("parallel",),           # frames shard across TCs (v7x)
            vmem_limit_bytes=vmem_limit),
        cost_estimate=pl.CostEstimate(flops=flops, transcendentals=0,
                                      bytes_accessed=bytes_accessed),
    )(jnp.asarray(idx, jnp.int32),
      *([video] * F),
      jnp.asarray(ph, jnp.bfloat16),
      jnp.asarray(pwt, jnp.bfloat16))

    if T_pad > T_out or PH > new_h or PW > new_w:
        out = out[:T_out, :, :new_h, :new_w]
    return out


# ------------------------------ module wrappers --------------------------------
class ResampleAudio:
    def __init__(self, new_fps):
        self.new_fps = new_fps

    def __call__(self, item):
        orig_fps = int(item['meta']['audio']['framerate'][0])
        item['meta']['audio']['orig_shape'] = tuple(item['audio'].shape)
        if orig_fps != self.new_fps:
            # TODO(synk): torchaudio.functional.resample (polyphase windowed-sinc filter)
            # has no faithful short Pallas equivalent; only the identity path is done.
            raise NotImplementedError("audio resampling (orig_fps != afps)")
        return item


class ResampleResizeLetterboxPad:
    """Pallas/JAX port of ResampleAudio -> ResampleRGB -> ResizeAndLetterboxPad."""

    def __init__(self, afps, vfps, new_h, new_w):
        self.afps, self.vfps = afps, vfps
        self.new_h, self.new_w = new_h, new_w
        self.audio_t = ResampleAudio(afps)

    def forward(self, item):
        # -- ResampleAudio ------------------------------------------------------
        item = self.audio_t(item)

        # -- ResampleRGB (host-side frame-index plan) ----------------------------
        vid = item['video']
        T, C, H, W = vid.shape
        orig_fps = float(item['meta']['video']['fps'][0])
        item['meta']['video']['orig_shape'] = tuple(vid.shape)
        if orig_fps != self.vfps:
            frame_idx = _resample_rgb_indices(T, orig_fps, self.vfps)
            item['meta']['video']['fps'][0] = self.vfps
        else:
            frame_idx = np.arange(T, dtype=np.int32)

        # -- ResizeAndLetterboxPad (fused Pallas kernel) -------------------------
        mats = _letterbox_matrices(H, W, self.new_h, self.new_w)
        if mats is None:
            # Equal aspect ratio: reference returns frames untouched; only the temporal
            # selection remains -- a pure strided copy best left to XLA.
            item['video'] = jnp.take(vid, jnp.asarray(frame_idx), axis=0)
            return item
        mh, mw = mats
        # TODO(synk): for uint8 sources the torchvision reference rounds back to uint8;
        # here the resized output is float32 (matches the float-input reference path).
        item['video'] = fused_resample_resize_pad(vid, frame_idx, mh, mw,
                                                  self.new_h, self.new_w)
        return item

    __call__ = forward


# ----------------------------------- main --------------------------------------
if __name__ == "__main__":
    key = jax.random.PRNGKey(0)

    # ---- Example 1: temporal downsample + pillarbox pad (W-first contraction) ----
    T, C, H, W = 8, 3, 32, 48            # 8 frames @ 8 fps, aspect ratio 1.5
    orig_vfps, vfps = 8.0, 4.0           # -> keep every other frame (4 frames out)
    new_h, new_w = 64, 128               # target aspect 2.0 -> pillarbox pad
    afps = 16000                         # matches audio framerate -> identity

    vid = jax.random.normal(key, (T, C, H, W), dtype=jnp.float32)
    audio = jax.random.normal(jax.random.fold_in(key, 1), (8000,), dtype=jnp.float32)
    item = {
        'video': vid,
        'audio': audio,
        'meta': {'video': {'fps': [orig_vfps]},
                 'audio': {'framerate': [afps]}},
        'path': 'synthetic',
        'split': 'valid',
    }

    module = ResampleResizeLetterboxPad(afps=afps, vfps=vfps, new_h=new_h, new_w=new_w)
    out = module.forward(item)
    jax.block_until_ready(out['video'])

    idx_np = _resample_rgb_indices(T, orig_vfps, vfps)
    ref = _reference_resize_pad(np.asarray(vid)[idx_np], new_h, new_w)
    got = np.asarray(out['video'])
    assert got.shape == (len(idx_np), C, new_h, new_w)
    assert got.dtype == np.float32
    np.testing.assert_allclose(got, ref, rtol=3e-2, atol=3e-2)

    # pillarbox padding columns must be exactly zero
    scaled_w = round(new_h * (W / H))
    left = (new_w - scaled_w) // 2
    assert np.all(got[..., :left] == 0.0)
    assert np.all(got[..., left + scaled_w:] == 0.0)

    # audio untouched (orig framerate == afps) and meta bookkeeping recorded
    np.testing.assert_array_equal(np.asarray(out['audio']), np.asarray(audio))
    assert out['meta']['video']['orig_shape'] == (T, C, H, W)
    assert out['meta']['audio']['orig_shape'] == (8000,)
    assert out['meta']['video']['fps'][0] == vfps

    # ---- Example 2: identity fps, H-first contraction, non-aligned output dims ----
    T2, C2, H2, W2 = 2, 3, 64, 16        # tall frames, aspect 0.25
    nh2, nw2 = 20, 32                    # target aspect 1.6 -> pillarbox; padded slab 24x128
    vid2 = jax.random.normal(jax.random.fold_in(key, 2), (T2, C2, H2, W2), dtype=jnp.float32)
    audio2 = jax.random.normal(jax.random.fold_in(key, 3), (4000,), dtype=jnp.float32)
    item2 = {
        'video': vid2,
        'audio': audio2,
        'meta': {'video': {'fps': [4.0]},
                 'audio': {'framerate': [afps]}},
        'path': 'synthetic2',
        'split': 'valid',
    }
    module2 = ResampleResizeLetterboxPad(afps=afps, vfps=4.0, new_h=nh2, new_w=nw2)
    out2 = module2.forward(item2)
    jax.block_until_ready(out2['video'])

    ref2 = _reference_resize_pad(np.asarray(vid2), nh2, nw2)
    got2 = np.asarray(out2['video'])
    assert got2.shape == (T2, C2, nh2, nw2)
    np.testing.assert_allclose(got2, ref2, rtol=3e-2, atol=3e-2)

    print("KERNEL_OK")
</pallas_src>

<mosaic_0001>
module attributes {stable_mosaic.version = 11 : i64} {
  func.func @kernel(%arg0: i32, %arg1: memref<4xi32, #tpu.memory_space<smem>>, %arg2: memref<1x3x32x48xf32, #tpu.memory_space<vmem>>, %arg3: memref<1x3x32x48xf32, #tpu.memory_space<vmem>>, %arg4: memref<1x3x32x48xf32, #tpu.memory_space<vmem>>, %arg5: memref<1x3x32x48xf32, #tpu.memory_space<vmem>>, %arg6: memref<64x32xbf16, #tpu.memory_space<vmem>>, %arg7: memref<48x128xbf16, #tpu.memory_space<vmem>>, %arg8: memref<4x3x64x128xf32, #tpu.memory_space<vmem>>) attributes {dimension_semantics = [#tpu.dimension_semantics<parallel>], iteration_bounds = array<i64: 1>, scalar_prefetch = 1 : i64, scratch_operands = 0 : i64, tpu.core_type = #tpu.core_type<tc>, window_params = [{transform_indices = @transform_0, window_bounds = array<i64: 1, 3, 32, 48>}, {transform_indices = @transform_1, window_bounds = array<i64: 1, 3, 32, 48>}, {transform_indices = @transform_2, window_bounds = array<i64: 1, 3, 32, 48>}, {transform_indices = @transform_3, window_bounds = array<i64: 1, 3, 32, 48>}, {pipeline_mode = #tpu.pipeline_mode<synchronous>, transform_indices = @transform_4, window_bounds = array<i64: 64, 32>}, {pipeline_mode = #tpu.pipeline_mode<synchronous>, transform_indices = @transform_5, window_bounds = array<i64: 48, 128>}, {transform_indices = @transform_6, window_bounds = array<i64: 4, 3, 64, 128>}]} {
    %c0 = arith.constant 0 : index
    %c0_0 = arith.constant 0 : index
    %0 = vector.load %arg6[%c0, %c0_0] : memref<64x32xbf16, #tpu.memory_space<vmem>>, vector<64x32xbf16>
    %c0_1 = arith.constant 0 : index
    %c0_2 = arith.constant 0 : index
    %1 = vector.load %arg7[%c0_1, %c0_2] : memref<48x128xbf16, #tpu.memory_space<vmem>>, vector<48x128xbf16>
    %c0_3 = arith.constant 0 : index
    %c0_4 = arith.constant 0 : index
    %c0_5 = arith.constant 0 : index
    %c0_6 = arith.constant 0 : index
    %2 = vector.load %arg2[%c0_3, %c0_4, %c0_5, %c0_6] : memref<1x3x32x48xf32, #tpu.memory_space<vmem>>, vector<1x3x32x48xf32>
    %3 = vector.shape_cast %2 : vector<1x3x32x48xf32> to vector<3x32x48xf32>
    %4 = arith.truncf %3 : vector<3x32x48xf32> to vector<3x32x48xbf16>
    %c0_7 = arith.constant 0 : index
    %c0_8 = arith.constant 0 : index
    %c0_9 = arith.constant 0 : index
    %c0_10 = arith.constant 0 : index
    %5 = vector.load %arg3[%c0_7, %c0_8, %c0_9, %c0_10] : memref<1x3x32x48xf32, #tpu.memory_space<vmem>>, vector<1x3x32x48xf32>
    %6 = vector.shape_cast %5 : vector<1x3x32x48xf32> to vector<3x32x48xf32>
    %7 = arith.truncf %6 : vector<3x32x48xf32> to vector<3x32x48xbf16>
    %c0_11 = arith.constant 0 : index
    %c0_12 = arith.constant 0 : index
    %c0_13 = arith.constant 0 : index
    %c0_14 = arith.constant 0 : index
    %8 = vector.load %arg4[%c0_11, %c0_12, %c0_13, %c0_14] : memref<1x3x32x48xf32, #tpu.memory_space<vmem>>, vector<1x3x32x48xf32>
    %9 = vector.shape_cast %8 : vector<1x3x32x48xf32> to vector<3x32x48xf32>
    %10 = arith.truncf %9 : vector<3x32x48xf32> to vector<3x32x48xbf16>
    %c0_15 = arith.constant 0 : index
    %c0_16 = arith.constant 0 : index
    %c0_17 = arith.constant 0 : index
    %c0_18 = arith.constant 0 : index
    %11 = vector.load %arg5[%c0_15, %c0_16, %c0_17, %c0_18] : memref<1x3x32x48xf32, #tpu.memory_space<vmem>>, vector<1x3x32x48xf32>
    %12 = vector.shape_cast %11 : vector<1x3x32x48xf32> to vector<3x32x48xf32>
    %13 = arith.truncf %12 : vector<3x32x48xf32> to vector<3x32x48xbf16>
    %14 = tpu.concatenate %4, %7, %10, %13 in 0 : vector<3x32x48xbf16>, vector<3x32x48xbf16>, vector<3x32x48xbf16>, vector<3x32x48xbf16> -> vector<12x32x48xbf16>
    %15 = vector.shape_cast %0 : vector<64x32xbf16> to vector<1x64x32xbf16>
    %16 = vector.shape_cast %15 : vector<1x64x32xbf16> to vector<1x64x32xbf16>
    %17 = vector.broadcast %16 : vector<1x64x32xbf16> to vector<12x64x32xbf16>
    %18 = vector.shape_cast %14 : vector<12x32x48xbf16> to vector<384x48xbf16>
    %cst = arith.constant dense<0.000000e+00> : vector<384x128xf32>
    %19 = tpu.matmul %18, %1, %cst {dimension_numbers = #tpu.dot_dimension_numbers<[1], [0], [0], [1], [0, 0, 1, 1], [], []>} : vector<384x48xbf16>, vector<48x128xbf16>, vector<384x128xf32> -> vector<384x128xf32>
    %20 = vector.shape_cast %19 : vector<384x128xf32> to vector<12x32x128xf32>
    %21 = arith.truncf %20 : vector<12x32x128xf32> to vector<12x32x128xbf16>
    %cst_19 = arith.constant dense<0.000000e+00> : vector<12x64x128xf32>
    %22 = tpu.matmul %17, %21, %cst_19 {dimension_numbers = #tpu.dot_dimension_numbers<[2], [1], [1], [2], [0, 0, 0, 1, 1, 2], [0], [0]>} : vector<12x64x32xbf16>, vector<12x32x128xbf16>, vector<12x64x128xf32> -> vector<12x64x128xf32>
    %23 = vector.shape_cast %22 : vector<12x64x128xf32> to vector<4x3x64x128xf32>
    %c0_20 = arith.constant 0 : index
    %c0_21 = arith.constant 0 : index
    %c0_22 = arith.constant 0 : index
    %c0_23 = arith.constant 0 : index
    %24 = vector.load %arg8[%c0_20, %c0_21, %c0_22, %c0_23] : memref<4x3x64x128xf32, #tpu.memory_space<vmem>>, vector<4x3x64x128xf32>
    tpu.vector_store %arg8[%c0_20, %c0_21, %c0_22, %c0_23], %23 {strides = array<i32>} : memref<4x3x64x128xf32, #tpu.memory_space<vmem>>, vector<4x3x64x128xf32>,
    return
  }
  func.func @transform_0(%arg0: i32, %arg1: memref<4xi32, #tpu.memory_space<smem>>) -> (i32, i32, i32, i32) {
    %c4_i32 = arith.constant 4 : i32
    %0 = arith.muli %arg0, %c4_i32 : i32
    %c0_i32 = arith.constant 0 : i32
    %1 = arith.addi %0, %c0_i32 : i32
    %2 = arith.index_cast %1 : i32 to index
    %3 = memref.load %arg1[%2] : memref<4xi32, #tpu.memory_space<smem>>
    %c0_i32_0 = arith.constant 0 : i32
    %c0_i32_1 = arith.constant 0 : i32
    %c0_i32_2 = arith.constant 0 : i32
    %c0_i32_3 = arith.constant 0 : i32
    return %3, %c0_i32_0, %c0_i32_1, %c0_i32_2 : i32, i32, i32, i32
  }
  func.func @transform_1(%arg0: i32, %arg1: memref<4xi32, #tpu.memory_space<smem>>) -> (i32, i32, i32, i32) {
    %c4_i32 = arith.constant 4 : i32
    %0 = arith.muli %arg0, %c4_i32 : i32
    %c1_i32 = arith.constant 1 : i32
    %1 = arith.addi %0, %c1_i32 : i32
    %2 = arith.index_cast %1 : i32 to index
    %3 = memref.load %arg1[%2] : memref<4xi32, #tpu.memory_space<smem>>
    %c0_i32 = arith.constant 0 : i32
    %c0_i32_0 = arith.constant 0 : i32
    %c0_i32_1 = arith.constant 0 : i32
    %c0_i32_2 = arith.constant 0 : i32
    return %3, %c0_i32, %c0_i32_0, %c0_i32_1 : i32, i32, i32, i32
  }
  func.func @transform_2(%arg0: i32, %arg1: memref<4xi32, #tpu.memory_space<smem>>) -> (i32, i32, i32, i32) {
    %c4_i32 = arith.constant 4 : i32
    %0 = arith.muli %arg0, %c4_i32 : i32
    %c2_i32 = arith.constant 2 : i32
    %1 = arith.addi %0, %c2_i32 : i32
    %2 = arith.index_cast %1 : i32 to index
    %3 = memref.load %arg1[%2] : memref<4xi32, #tpu.memory_space<smem>>
    %c0_i32 = arith.constant 0 : i32
    %c0_i32_0 = arith.constant 0 : i32
    %c0_i32_1 = arith.constant 0 : i32
    %c0_i32_2 = arith.constant 0 : i32
    return %3, %c0_i32, %c0_i32_0, %c0_i32_1 : i32, i32, i32, i32
  }
  func.func @transform_3(%arg0: i32, %arg1: memref<4xi32, #tpu.memory_space<smem>>) -> (i32, i32, i32, i32) {
    %c4_i32 = arith.constant 4 : i32
    %0 = arith.muli %arg0, %c4_i32 : i32
    %c3_i32 = arith.constant 3 : i32
    %1 = arith.addi %0, %c3_i32 : i32
    %2 = arith.index_cast %1 : i32 to index
    %3 = memref.load %arg1[%2] : memref<4xi32, #tpu.memory_space<smem>>
    %c0_i32 = arith.constant 0 : i32
    %c0_i32_0 = arith.constant 0 : i32
    %c0_i32_1 = arith.constant 0 : i32
    %c0_i32_2 = arith.constant 0 : i32
    return %3, %c0_i32, %c0_i32_0, %c0_i32_1 : i32, i32, i32, i32
  }
  func.func @transform_4(%arg0: i32, %arg1: memref<4xi32, #tpu.memory_space<smem>>) -> (i32, i32) {
    %c0_i32 = arith.constant 0 : i32
    %c0_i32_0 = arith.constant 0 : i32
    %c0_i32_1 = arith.constant 0 : i32
    return %c0_i32, %c0_i32_0 : i32, i32
  }
  func.func @transform_5(%arg0: i32, %arg1: memref<4xi32, #tpu.memory_space<smem>>) -> (i32, i32) {
    %c0_i32 = arith.constant 0 : i32
    %c0_i32_0 = arith.constant 0 : i32
    %c0_i32_1 = arith.constant 0 : i32
    return %c0_i32, %c0_i32_0 : i32, i32
  }
  func.func @transform_6(%arg0: i32, %arg1: memref<4xi32, #tpu.memory_space<smem>>) -> (i32, i32, i32, i32) {
    %c0_i32 = arith.constant 0 : i32
    %c0_i32_0 = arith.constant 0 : i32
    %c0_i32_1 = arith.constant 0 : i32
    %c0_i32_2 = arith.constant 0 : i32
    return %arg0, %c0_i32, %c0_i32_0, %c0_i32_1 : i32, i32, i32, i32
  }
}

</mosaic_0001>

<llo_original>
// kernel: tpu_custom_call.1
$region0: #{tpu_custom_call.1}
  #allocation0 [shape = 'u32[]', space=smem, size = 0x4, offset = 0x4, fixed_abs, tag = 'smem constant byte address 0x4 - core index']
  #allocation1 [shape = 'u32[72,128]{1,0:T(1,128)}', space=vmem, size = 0x9000, scoped, tag = 'internal scratch']
  #allocation2 [shape = 's32[1]{0}', space=sflag, size = 0x4, scoped, tag = 'scoped memory for tpu_custom_call.1']
  #allocation3 [shape = 'u8[512]{0}', space=smem, size = 0x200, scoped, tag = 'prefetched SMEM operand 0']
  %s0 = inlined_call_operand.vmem [shape: s32[4], index: 0, kind: input, shape index: {}]
  %s1 = inlined_call_operand.hbm [shape: f32[8,3,32,48], index: 1, kind: input, shape index: {}]
  %s2 = inlined_call_operand.hbm [shape: f32[8,3,32,48], index: 2, kind: input, shape index: {}]
  %s3 = inlined_call_operand.hbm [shape: f32[8,3,32,48], index: 3, kind: input, shape index: {}]
  %s4 = inlined_call_operand.hbm [shape: f32[8,3,32,48], index: 4, kind: input, shape index: {}]
  %s5 = inlined_call_operand.vmem [shape: bf16[64,32], index: 5, kind: input, shape index: {}]
  %s6 = inlined_call_operand.vmem [shape: bf16[48,128], index: 6, kind: input, shape index: {}]
  %s7 = inlined_call_operand.hbm [shape: f32[4,3,64,128], index: 7, kind: output, shape index: {}]
  %s8 = sld [smem:[#allocation0]]
  $region50: #{tpu_custom_call.1} parent=0
    _
  %s10 = ssub.s32 1, %s8
  %s11 = scalar_select 0, %s10, %s8
  %s13 = sshll.u32 %s0, 4
  %s14 = int_to_ptr.vmem [resolvable:$true] %s13
  %16 = dma.vmem_to_smem %s14, 16, [#allocation3], [#allocation2]
  %18 = dma.done [#allocation2], 16
  %19 = sfence
  $region1: #{tpu_custom_call.1} parent=0
    #allocation4 [shape = 'u8[49152]{0}', space=vmem, size = 0xc000, scoped, tag = 'input window, operand 1, single buffered']
    #allocation5 [shape = 's32[1]{0}', space=sflag, size = 0x4, scoped, tag = 'scoped memory for tpu_custom_call.1']
    #allocation6 [shape = 's32[1]{0}', space=sflag, size = 0x4, scoped, tag = 'scoped memory for tpu_custom_call.1']
    #allocation7 [shape = 'u8[49152]{0}', space=vmem, size = 0xc000, scoped, tag = 'input window, operand 2, single buffered']
    #allocation8 [shape = 's32[1]{0}', space=sflag, size = 0x4, scoped, tag = 'scoped memory for tpu_custom_call.1']
    #allocation9 [shape = 'u8[49152]{0}', space=vmem, size = 0xc000, scoped, tag = 'input window, operand 3, single buffered']
    #allocation10 [shape = 'u8[49152]{0}', space=vmem, size = 0xc000, scoped, tag = 'input window, operand 4, single buffered']
    #allocation11 [shape = 's32[1]{0}', space=sflag, size = 0x4, scoped, tag = 'scoped memory for tpu_custom_call.1']
    #allocation12 [shape = 'u8[393216]{0}', space=vmem, size = 0x60000, scoped, tag = 'output window, operand 0, single buffered']
    %20 = vsyncpa [#allocation5], 0
    %21 = vsyncpa [#allocation8], 0
    %22 = vsyncpa [#allocation11], 0
    %23 = vsyncpa [#allocation6], 0
    // Predicated region
    $region2: #{tpu_custom_call.1} parent=1 // pred_check
      _
    $region3: #{tpu_custom_call.1} parent=1 // pred_check_branch
      %25 = sbr.rel (0) target = $region5
    $region4: #{tpu_custom_call.1} parent=1 // pred_region
      %s26 = smul.u32 0, 4
      %s27 = sld [smem:[#allocation3 + %s26]]
      %29 = vsyncadd [#allocation5], 0
      %s30 = smul.addr %s27, 12
      %s31 = smul.addr %s30, 8
      %s32 = scalar_lea.hbm %s1, %s31
      %s33 = sshll.u32 %s32, 4
      %s34 = int_to_ptr.hbm [resolvable:$true] %s33
      %s35 = sshll.u32 [#allocation4], 4
      %s36 = int_to_ptr.vmem [resolvable:$true] %s35
      %41 = dma.hbm_to_vmem [thread:$0]  %s34, 1536, %s36, [#allocation5], 128, 128, 8
    $region5: #{tpu_custom_call.1} parent=1 // pred_fallthru
      _
    // Predicated region
    $region6: #{tpu_custom_call.1} parent=1 // pred_check
      _
    $region7: #{tpu_custom_call.1} parent=1 // pred_check_branch
      %43 = sbr.rel (0) target = $region9
    $region8: #{tpu_custom_call.1} parent=1 // pred_region
      %s44 = smul.u32 0, 4
      %s45 = sadd.s32 %s44, 1
      %s46 = sld [smem:[#allocation3 + %s45]]
      %48 = vsyncadd [#allocation8], 0
      %s49 = smul.addr %s46, 12
      %s50 = smul.addr %s49, 8
      %s51 = scalar_lea.hbm %s2, %s50
      %s52 = sshll.u32 %s51, 4
      %s53 = int_to_ptr.hbm [resolvable:$true] %s52
      %s54 = sshll.u32 [#allocation7], 4
      %s55 = int_to_ptr.vmem [resolvable:$true] %s54
      %60 = dma.hbm_to_vmem [thread:$0]  %s53, 1536, %s55, [#allocation8], 128, 128, 8
    $region9: #{tpu_custom_call.1} parent=1 // pred_fallthru
      _
    // Predicated region
    $region10: #{tpu_custom_call.1} parent=1 // pred_check
      _
    $region11: #{tpu_custom_call.1} parent=1 // pred_check_branch
      %62 = sbr.rel (0) target = $region13
    $region12: #{tpu_custom_call.1} parent=1 // pred_region
      %s63 = smul.u32 0, 4
      %s64 = sadd.s32 %s63, 2
      %s65 = sld [smem:[#allocation3 + %s64]]
      %67 = vsyncadd [#allocation8], 0
      %s68 = smul.addr %s65, 12
      %s69 = smul.addr %s68, 8
      %s70 = scalar_lea.hbm %s3, %s69
      %s71 = sshll.u32 %s70, 4
      %s72 = int_to_ptr.hbm [resolvable:$true] %s71
      %s73 = sshll.u32 [#allocation9], 4
      %s74 = int_to_ptr.vmem [resolvable:$true] %s73
      %79 = dma.hbm_to_vmem [thread:$0]  %s72, 1536, %s74, [#allocation8], 128, 128, 8
    $region13: #{tpu_custom_call.1} parent=1 // pred_fallthru
      _
    // Predicated region
    $region14: #{tpu_custom_call.1} parent=1 // pred_check
      _
    $region15: #{tpu_custom_call.1} parent=1 // pred_check_branch
      %81 = sbr.rel (0) target = $region17
    $region16: #{tpu_custom_call.1} parent=1 // pred_region
      %s82 = smul.u32 0, 4
      %s83 = sadd.s32 %s82, 3
      %s84 = sld [smem:[#allocation3 + %s83]]
      %86 = vsyncadd [#allocation11], 0
      %s87 = smul.addr %s84, 12
      %s88 = smul.addr %s87, 8
      %s89 = scalar_lea.hbm %s4, %s88
      %s90 = sshll.u32 %s89, 4
      %s91 = int_to_ptr.hbm [resolvable:$true] %s90
      %s92 = sshll.u32 [#allocation10], 4
      %s93 = int_to_ptr.vmem [resolvable:$true] %s92
      %98 = dma.hbm_to_vmem [thread:$0]  %s91, 1536, %s93, [#allocation11], 128, 128, 8
    $region17: #{tpu_custom_call.1} parent=1 // pred_fallthru
      _
    // Predicated region
    $region18: #{tpu_custom_call.1} parent=1 // pred_check
      _
    $region19: #{tpu_custom_call.1} parent=1 // pred_check_branch
      %100 = sbr.rel (0) target = $region21
    $region20: #{tpu_custom_call.1} parent=1 // pred_region
      _
    $region21: #{tpu_custom_call.1} parent=1 // pred_fallthru
      _
    // Predicated region
    $region22: #{tpu_custom_call.1} parent=1 // pred_check
      _
    $region23: #{tpu_custom_call.1} parent=1 // pred_check_branch
      %102 = sbr.rel (0) target = $region25
    $region24: #{tpu_custom_call.1} parent=1 // pred_region
      _
    $region25: #{tpu_custom_call.1} parent=1 // pred_fallthru
      _
    // Predicated region
    $region26: #{tpu_custom_call.1} parent=1 // pred_check
      _
    $region27: #{tpu_custom_call.1} parent=1 // pred_check_branch
      %104 = sbr.rel (0) target = $region29
    $region28: #{tpu_custom_call.1} parent=1 // pred_region
      %106 = dma.done [#allocation5], 1536
    $region29: #{tpu_custom_call.1} parent=1 // pred_fallthru
      _
    // Predicated region
    $region30: #{tpu_custom_call.1} parent=1 // pred_check
      _
    $region31: #{tpu_custom_call.1} parent=1 // pred_check_branch
      %108 = sbr.rel (0) target = $region33
    $region32: #{tpu_custom_call.1} parent=1 // pred_region
      %110 = dma.done [#allocation8], 1536
    $region33: #{tpu_custom_call.1} parent=1 // pred_fallthru
      _
    // Predicated region
    $region34: #{tpu_custom_call.1} parent=1 // pred_check
      _
    $region35: #{tpu_custom_call.1} parent=1 // pred_check_branch
      %112 = sbr.rel (0) target = $region37
    $region36: #{tpu_custom_call.1} parent=1 // pred_region
      %114 = dma.done [#allocation8], 1536
    $region37: #{tpu_custom_call.1} parent=1 // pred_fallthru
      _
    // Predicated region
    $region38: #{tpu_custom_call.1} parent=1 // pred_check
      _
    $region39: #{tpu_custom_call.1} parent=1 // pred_check_branch
      %116 = sbr.rel (0) target = $region41
    $region40: #{tpu_custom_call.1} parent=1 // pred_region
      %118 = dma.done [#allocation11], 1536
    $region41: #{tpu_custom_call.1} parent=1 // pred_fallthru
      _
    %s119 = smul.u32 0, 4
    %s120 = sld [smem:[#allocation3 + %s119]]
    %s121 = smul.u32 0, 4
    %s122 = sadd.s32 %s121, 1
    %s123 = sld [smem:[#allocation3 + %s122]]
    %s124 = smul.u32 0, 4
    %s125 = sadd.s32 %s124, 2
    %s126 = sld [smem:[#allocation3 + %s125]]
    %s127 = smul.u32 0, 4
    %s128 = sadd.s32 %s127, 3
    %s129 = sld [smem:[#allocation3 + %s128]]
    %v131 = vld [vmem:[%s5] sm:$0xf]
    %v132 = vld [vmem:[%s5 + $0x4] sm:$0xf]
    %v133 = vld [vmem:[%s5 + $0x8] sm:$0xf]
    %v134 = vld [vmem:[%s5 + $0xc] sm:$0xf]
    %v135 = vld [vmem:[%s5 + $0x10] sm:$0xf]
    %v136 = vld [vmem:[%s5 + $0x14] sm:$0xf]
    %v137 = vld [vmem:[%s5 + $0x18] sm:$0xf]
    %v138 = vld [vmem:[%s5 + $0x1c] sm:$0xf]
    %v139 = vld [vmem:[%s6] sm:$0xf]
    %v140 = vld [vmem:[%s6 + $0x4] sm:$0xf]
    %v141 = vld [vmem:[%s6 + $0x8] sm:$0xf]
    %v142 = vld [vmem:[%s6 + $0xc] sm:$0xf]
    %v143 = vld [vmem:[%s6 + $0x10] sm:$0xf]
    %v144 = vld [vmem:[%s6 + $0x14] sm:$0xf]
    %v145 = vld [vmem:[#allocation4] sm:$0xff]
    %v146 = vld [vmem:[#allocation4 + $0x8] sm:$0xff]
    %v147 = vld [vmem:[#allocation4 + $0x10] sm:$0xff]
    %v148 = vld [vmem:[#allocation4 + $0x18] sm:$0xff]
    %v149 = vld [vmem:[#allocation4 + $0x20] sm:$0xff]
    %v150 = vld [vmem:[#allocation4 + $0x28] sm:$0xff]
    %v151 = vld [vmem:[#allocation4 + $0x30] sm:$0xff]
    %v152 = vld [vmem:[#allocation4 + $0x38] sm:$0xff]
    %v153 = vld [vmem:[#allocation4 + $0x40] sm:$0xff]
    %v154 = vld [vmem:[#allocation4 + $0x48] sm:$0xff]
    %v155 = vld [vmem:[#allocation4 + $0x50] sm:$0xff]
    %v156 = vld [vmem:[#allocation4 + $0x58] sm:$0xff]
    %v157 = vpack.c.bf16 %v145, %v145
    %v158 = vpack.c.bf16 %v146, %v146
    %v159 = vpack.c.bf16 %v147, %v147
    %v160 = vpack.c.bf16 %v148, %v148
    %v161 = vpack.c.bf16 %v149, %v149
    %v162 = vpack.c.bf16 %v150, %v150
    %v163 = vpack.c.bf16 %v151, %v151
    %v164 = vpack.c.bf16 %v152, %v152
    %v165 = vpack.c.bf16 %v153, %v153
    %v166 = vpack.c.bf16 %v154, %v154
    %v167 = vpack.c.bf16 %v155, %v155
    %v168 = vpack.c.bf16 %v156, %v156
    %v169 = vld [vmem:[#allocation7] sm:$0xff]
    %v170 = vld [vmem:[#allocation7 + $0x8] sm:$0xff]
    %v171 = vld [vmem:[#allocation7 + $0x10] sm:$0xff]
    %v172 = vld [vmem:[#allocation7 + $0x18] sm:$0xff]
    %v173 = vld [vmem:[#allocation7 + $0x20] sm:$0xff]
    %v174 = vld [vmem:[#allocation7 + $0x28] sm:$0xff]
    %v175 = vld [vmem:[#allocation7 + $0x30] sm:$0xff]
    %v176 = vld [vmem:[#allocation7 + $0x38] sm:$0xff]
    %v177 = vld [vmem:[#allocation7 + $0x40] sm:$0xff]
    %v178 = vld [vmem:[#allocation7 + $0x48] sm:$0xff]
    %v179 = vld [vmem:[#allocation7 + $0x50] sm:$0xff]
    %v180 = vld [vmem:[#allocation7 + $0x58] sm:$0xff]
    %v181 = vpack.c.bf16 %v169, %v169
    %v182 = vpack.c.bf16 %v170, %v170
    %v183 = vpack.c.bf16 %v171, %v171
    %v184 = vpack.c.bf16 %v172, %v172
    %v185 = vpack.c.bf16 %v173, %v173
    %v186 = vpack.c.bf16 %v174, %v174
    %v187 = vpack.c.bf16 %v175, %v175
    %v188 = vpack.c.bf16 %v176, %v176
    %v189 = vpack.c.bf16 %v177, %v177
    %v190 = vpack.c.bf16 %v178, %v178
    %v191 = vpack.c.bf16 %v179, %v179
    %v192 = vpack.c.bf16 %v180, %v180
    %v193 = vld [vmem:[#allocation9] sm:$0xff]
    %v194 = vld [vmem:[#allocation9 + $0x8] sm:$0xff]
    %v195 = vld [vmem:[#allocation9 + $0x10] sm:$0xff]
    %v196 = vld [vmem:[#allocation9 + $0x18] sm:$0xff]
    %v197 = vld [vmem:[#allocation9 + $0x20] sm:$0xff]
    %v198 = vld [vmem:[#allocation9 + $0x28] sm:$0xff]
    %v199 = vld [vmem:[#allocation9 + $0x30] sm:$0xff]
    %v200 = vld [vmem:[#allocation9 + $0x38] sm:$0xff]
    %v201 = vld [vmem:[#allocation9 + $0x40] sm:$0xff]
    %v202 = vld [vmem:[#allocation9 + $0x48] sm:$0xff]
    %v203 = vld [vmem:[#allocation9 + $0x50] sm:$0xff]
    %v204 = vld [vmem:[#allocation9 + $0x58] sm:$0xff]
    %v205 = vpack.c.bf16 %v193, %v193
    %v206 = vpack.c.bf16 %v194, %v194
    %v207 = vpack.c.bf16 %v195, %v195
    %v208 = vpack.c.bf16 %v196, %v196
    %v209 = vpack.c.bf16 %v197, %v197
    %v210 = vpack.c.bf16 %v198, %v198
    %v211 = vpack.c.bf16 %v199, %v199
    %v212 = vpack.c.bf16 %v200, %v200
    %v213 = vpack.c.bf16 %v201, %v201
    %v214 = vpack.c.bf16 %v202, %v202
    %v215 = vpack.c.bf16 %v203, %v203
    %v216 = vpack.c.bf16 %v204, %v204
    %v217 = vld [vmem:[#allocation10] sm:$0xff]
    %v218 = vld [vmem:[#allocation10 + $0x8] sm:$0xff]
    %v219 = vld [vmem:[#allocation10 + $0x10] sm:$0xff]
    %v220 = vld [vmem:[#allocation10 + $0x18] sm:$0xff]
    %v221 = vld [vmem:[#allocation10 + $0x20] sm:$0xff]
    %v222 = vld [vmem:[#allocation10 + $0x28] sm:$0xff]
    %v223 = vld [vmem:[#allocation10 + $0x30] sm:$0xff]
    %v224 = vld [vmem:[#allocation10 + $0x38] sm:$0xff]
    %v225 = vld [vmem:[#allocation10 + $0x40] sm:$0xff]
    %v226 = vld [vmem:[#allocation10 + $0x48] sm:$0xff]
    %v227 = vld [vmem:[#allocation10 + $0x50] sm:$0xff]
    %v228 = vld [vmem:[#allocation10 + $0x58] sm:$0xff]
    %v229 = vpack.c.bf16 %v217, %v217
    %v230 = vpack.c.bf16 %v218, %v218
    %v231 = vpack.c.bf16 %v219, %v219
    %v232 = vpack.c.bf16 %v220, %v220
    %v233 = vpack.c.bf16 %v221, %v221
    %v234 = vpack.c.bf16 %v222, %v222
    %v235 = vpack.c.bf16 %v223, %v223
    %v236 = vpack.c.bf16 %v224, %v224
    %v237 = vpack.c.bf16 %v225, %v225
    %v238 = vpack.c.bf16 %v226, %v226
    %v239 = vpack.c.bf16 %v227, %v227
    %v240 = vpack.c.bf16 %v228, %v228
    %v289 = vunpack.c.l.b16 %v157
    %v290 = vunpack.c.l.b16 %v158
    %v291 = vunpack.c.l.b16 %v159
    %v292 = vunpack.c.l.b16 %v160
    %v293 = vunpack.c.l.b16 %v161
    %v294 = vunpack.c.l.b16 %v162
    %v295 = vunpack.c.l.b16 %v163
    %v296 = vunpack.c.l.b16 %v164
    %v297 = vunpack.c.l.b16 %v165
    %v298 = vunpack.c.l.b16 %v166
    %v299 = vunpack.c.l.b16 %v167
    %v300 = vunpack.c.l.b16 %v168
    %v301 = vunpack.c.l.b16 %v181
    %v302 = vunpack.c.l.b16 %v182
    %v303 = vunpack.c.l.b16 %v183
    %v304 = vunpack.c.l.b16 %v184
    %v305 = vunpack.c.l.b16 %v185
    %v306 = vunpack.c.l.b16 %v186
    %v307 = vunpack.c.l.b16 %v187
    %v308 = vunpack.c.l.b16 %v188
    %v309 = vunpack.c.l.b16 %v189
    %v310 = vunpack.c.l.b16 %v190
    %v311 = vunpack.c.l.b16 %v191
    %v312 = vunpack.c.l.b16 %v192
    %v313 = vunpack.c.l.b16 %v205
    %v314 = vunpack.c.l.b16 %v206
    %v315 = vunpack.c.l.b16 %v207
    %v316 = vunpack.c.l.b16 %v208
    %v317 = vunpack.c.l.b16 %v209
    %v318 = vunpack.c.l.b16 %v210
    %v319 = vunpack.c.l.b16 %v211
    %v320 = vunpack.c.l.b16 %v212
    %v321 = vunpack.c.l.b16 %v213
    %v322 = vunpack.c.l.b16 %v214
    %v323 = vunpack.c.l.b16 %v215
    %v324 = vunpack.c.l.b16 %v216
    %v325 = vunpack.c.l.b16 %v229
    %v326 = vunpack.c.l.b16 %v230
    %v327 = vunpack.c.l.b16 %v231
    %v328 = vunpack.c.l.b16 %v232
    %v329 = vunpack.c.l.b16 %v233
    %v330 = vunpack.c.l.b16 %v234
    %v331 = vunpack.c.l.b16 %v235
    %v332 = vunpack.c.l.b16 %v236
    %v333 = vunpack.c.l.b16 %v237
    %v334 = vunpack.c.l.b16 %v238
    %v335 = vunpack.c.l.b16 %v239
    %v336 = vunpack.c.l.b16 %v240
    %v337 = vpack.c.b16 %v290, %v289
    %v338 = vpack.c.b16 %v292, %v291
    %v339 = vpack.c.b16 %v294, %v293
    %v340 = vpack.c.b16 %v296, %v295
    %v341 = vpack.c.b16 %v298, %v297
    %v342 = vpack.c.b16 %v300, %v299
    %v343 = vpack.c.b16 %v302, %v301
    %v344 = vpack.c.b16 %v304, %v303
    %v345 = vpack.c.b16 %v306, %v305
    %v346 = vpack.c.b16 %v308, %v307
    %v347 = vpack.c.b16 %v310, %v309
    %v348 = vpack.c.b16 %v312, %v311
    %v349 = vpack.c.b16 %v314, %v313
    %v350 = vpack.c.b16 %v316, %v315
    %v351 = vpack.c.b16 %v318, %v317
    %v352 = vpack.c.b16 %v320, %v319
    %v353 = vpack.c.b16 %v322, %v321
    %v354 = vpack.c.b16 %v324, %v323
    %v355 = vpack.c.b16 %v326, %v325
    %v356 = vpack.c.b16 %v328, %v327
    %v357 = vpack.c.b16 %v330, %v329
    %v358 = vpack.c.b16 %v332, %v331
    %v359 = vpack.c.b16 %v334, %v333
    %v360 = vpack.c.b16 %v336, %v335
    %v367 = vunpack.c.l.b16 %v139
    %v368 = vunpack.c.l.b16 %v140
    %v369 = vunpack.c.l.b16 %v141
    %v370 = vunpack.c.l.b16 %v142
    %v371 = vunpack.c.l.b16 %v143
    %v372 = vunpack.c.l.b16 %v144
    %v373 = vpack.c.b16 %v368, %v367
    %v374 = vpack.c.b16 %v370, %v369
    %v375 = vpack.c.b16 %v372, %v371
    %vm379 = vcmask 392192
    %v381 = vsel %vm379, %v337, 0
    %v384 = vsel %vm379, %v338, 0
    %v387 = vsel %vm379, %v339, 0
    %v390 = vsel %vm379, %v340, 0
    %v393 = vsel %vm379, %v341, 0
    %v396 = vsel %vm379, %v342, 0
    %v399 = vsel %vm379, %v343, 0
    %v402 = vsel %vm379, %v344, 0
    %v405 = vsel %vm379, %v345, 0
    %v408 = vsel %vm379, %v346, 0
    %v411 = vsel %vm379, %v347, 0
    %v414 = vsel %vm379, %v348, 0
    %v417 = vsel %vm379, %v349, 0
    %v420 = vsel %vm379, %v350, 0
    %v423 = vsel %vm379, %v351, 0
    %v426 = vsel %vm379, %v352, 0
    %v429 = vsel %vm379, %v353, 0
    %v432 = vsel %vm379, %v354, 0
    %v435 = vsel %vm379, %v355, 0
    %v438 = vsel %vm379, %v356, 0
    %v441 = vsel %vm379, %v357, 0
    %v444 = vsel %vm379, %v358, 0
    %v447 = vsel %vm379, %v359, 0
    %v450 = vsel %vm379, %v360, 0
    %452 = vmatpush.bf16.msra.mxu0 0
    %453 = vmatpush.bf16.msra.mxu0 0
    %454 = vmatpush.bf16.msra.mxu0 0
    %455 = vmatpush.bf16.msra.mxu0 0
    %456 = vmatpush.bf16.msra.mxu0 0
    %457 = vmatpush.bf16.msra.mxu0 %v375
    %458 = vmatpush.bf16.msra.mxu0 %v374
    %459 = vmatpush.bf16.msra.mxu0 %v373
    %460 = vmatmul.bf16.gmra.mxu0 %v381
    %v461 = vpop.f32.mrf.mxu0
    %v462 = vadd.f32 0.0, %v461
    %v463 = vpop.f32.mrf.mxu0
    %v464 = vadd.f32 0.0, %v463
    %465 = vmatmul.bf16.gmra.mxu0 %v384
    %v466 = vpop.f32.mrf.mxu0
    %v467 = vadd.f32 0.0, %v466
    %v468 = vpop.f32.mrf.mxu0
    %v469 = vadd.f32 0.0, %v468
    %470 = vmatmul.bf16.gmra.mxu0 %v387
    %v471 = vpop.f32.mrf.mxu0
    %v472 = vadd.f32 0.0, %v471
    %v473 = vpop.f32.mrf.mxu0
    %v474 = vadd.f32 0.0, %v473
    %475 = vmatmul.bf16.gmra.mxu0 %v390
    %v476 = vpop.f32.mrf.mxu0
    %v477 = vadd.f32 0.0, %v476
    %v478 = vpop.f32.mrf.mxu0
    %v479 = vadd.f32 0.0, %v478
    %480 = vmatmul.bf16.gmra.mxu0 %v393
    %v481 = vpop.f32.mrf.mxu0
    %v482 = vadd.f32 0.0, %v481
    %v483 = vpop.f32.mrf.mxu0
    %v484 = vadd.f32 0.0, %v483
    %485 = vmatmul.bf16.gmra.mxu0 %v396
    %v486 = vpop.f32.mrf.mxu0
    %v487 = vadd.f32 0.0, %v486
    %v488 = vpop.f32.mrf.mxu0
    %v489 = vadd.f32 0.0, %v488
    %490 = vmatmul.bf16.gmra.mxu0 %v399
    %v491 = vpop.f32.mrf.mxu0
    %v492 = vadd.f32 0.0, %v491
    %v493 = vpop.f32.mrf.mxu0
    %v494 = vadd.f32 0.0, %v493
    %495 = vmatmul.bf16.gmra.mxu0 %v402
    %v496 = vpop.f32.mrf.mxu0
    %v497 = vadd.f32 0.0, %v496
    %v498 = vpop.f32.mrf.mxu0
    %v499 = vadd.f32 0.0, %v498
    %500 = vmatmul.bf16.gmra.mxu0 %v405
    %v501 = vpop.f32.mrf.mxu0
    %v502 = vadd.f32 0.0, %v501
    %v503 = vpop.f32.mrf.mxu0
    %v504 = vadd.f32 0.0, %v503
    %505 = vmatmul.bf16.gmra.mxu0 %v408
    %v506 = vpop.f32.mrf.mxu0
    %v507 = vadd.f32 0.0, %v506
    %v508 = vpop.f32.mrf.mxu0
    %v509 = vadd.f32 0.0, %v508
    %510 = vmatmul.bf16.gmra.mxu0 %v411
    %v511 = vpop.f32.mrf.mxu0
    %v512 = vadd.f32 0.0, %v511
    %v513 = vpop.f32.mrf.mxu0
    %v514 = vadd.f32 0.0, %v513
    %515 = vmatmul.bf16.gmra.mxu0 %v414
    %v516 = vpop.f32.mrf.mxu0
    %v517 = vadd.f32 0.0, %v516
    %v518 = vpop.f32.mrf.mxu0
    %v519 = vadd.f32 0.0, %v518
    %520 = vmatmul.bf16.gmra.mxu0 %v417
    %v521 = vpop.f32.mrf.mxu0
    %v522 = vadd.f32 0.0, %v521
    %v523 = vpop.f32.mrf.mxu0
    %v524 = vadd.f32 0.0, %v523
    %525 = vmatmul.bf16.gmra.mxu0 %v420
    %v526 = vpop.f32.mrf.mxu0
    %v527 = vadd.f32 0.0, %v526
    %v528 = vpop.f32.mrf.mxu0
    %v529 = vadd.f32 0.0, %v528
    %530 = vmatmul.bf16.gmra.mxu0 %v423
    %v531 = vpop.f32.mrf.mxu0
    %v532 = vadd.f32 0.0, %v531
    %v533 = vpop.f32.mrf.mxu0
    %v534 = vadd.f32 0.0, %v533
    %535 = vmatmul.bf16.gmra.mxu0 %v426
    %v536 = vpop.f32.mrf.mxu0
    %v537 = vadd.f32 0.0, %v536
    %v538 = vpop.f32.mrf.mxu0
    %v539 = vadd.f32 0.0, %v538
    %540 = vmatmul.bf16.gmra.mxu0 %v429
    %v541 = vpop.f32.mrf.mxu0
    %v542 = vadd.f32 0.0, %v541
    %v543 = vpop.f32.mrf.mxu0
    %v544 = vadd.f32 0.0, %v543
    %545 = vmatmul.bf16.gmra.mxu0 %v432
    %v546 = vpop.f32.mrf.mxu0
    %v547 = vadd.f32 0.0, %v546
    %v548 = vpop.f32.mrf.mxu0
    %v549 = vadd.f32 0.0, %v548
    %550 = vmatmul.bf16.gmra.mxu0 %v435
    %v551 = vpop.f32.mrf.mxu0
    %v552 = vadd.f32 0.0, %v551
    %v553 = vpop.f32.mrf.mxu0
    %v554 = vadd.f32 0.0, %v553
    %555 = vmatmul.bf16.gmra.mxu0 %v438
    %v556 = vpop.f32.mrf.mxu0
    %v557 = vadd.f32 0.0, %v556
    %v558 = vpop.f32.mrf.mxu0
    %v559 = vadd.f32 0.0, %v558
    %560 = vmatmul.bf16.gmra.mxu0 %v441
    %v561 = vpop.f32.mrf.mxu0
    %v562 = vadd.f32 0.0, %v561
    %v563 = vpop.f32.mrf.mxu0
    %v564 = vadd.f32 0.0, %v563
    %565 = vmatmul.bf16.gmra.mxu0 %v444
    %v566 = vpop.f32.mrf.mxu0
    %v567 = vadd.f32 0.0, %v566
    %v568 = vpop.f32.mrf.mxu0
    %v569 = vadd.f32 0.0, %v568
    %570 = vmatmul.bf16.gmra.mxu0 %v447
    %v571 = vpop.f32.mrf.mxu0
    %v572 = vadd.f32 0.0, %v571
    %v573 = vpop.f32.mrf.mxu0
    %v574 = vadd.f32 0.0, %v573
    %575 = vmatmul.bf16.gmra.mxu0 %v450
    %v576 = vpop.f32.mrf.mxu0
    %v577 = vadd.f32 0.0, %v576
    %v578 = vpop.f32.mrf.mxu0
    %v579 = vadd.f32 0.0, %v578
    %580 = vdwg.mxu0
    %v581 = vpack.c.bf16 %v462, %v462
    %v582 = vpack.c.bf16 %v464, %v464
    %v583 = vpack.c.bf16 %v467, %v467
    %v584 = vpack.c.bf16 %v469, %v469
    %v585 = vpack.c.bf16 %v472, %v472
    %v586 = vpack.c.bf16 %v474, %v474
    %v587 = vpack.c.bf16 %v477, %v477
    %v588 = vpack.c.bf16 %v479, %v479
    %v589 = vpack.c.bf16 %v482, %v482
    %v590 = vpack.c.bf16 %v484, %v484
    %v591 = vpack.c.bf16 %v487, %v487
    %v592 = vpack.c.bf16 %v489, %v489
    %v593 = vpack.c.bf16 %v492, %v492
    %v594 = vpack.c.bf16 %v494, %v494
    %v595 = vpack.c.bf16 %v497, %v497
    %v596 = vpack.c.bf16 %v499, %v499
    %v597 = vpack.c.bf16 %v502, %v502
    %v598 = vpack.c.bf16 %v504, %v504
    %v599 = vpack.c.bf16 %v507, %v507
    %v600 = vpack.c.bf16 %v509, %v509
    %v601 = vpack.c.bf16 %v512, %v512
    %v602 = vpack.c.bf16 %v514, %v514
    %v603 = vpack.c.bf16 %v517, %v517
    %v604 = vpack.c.bf16 %v519, %v519
    %v605 = vpack.c.bf16 %v522, %v522
    %v606 = vpack.c.bf16 %v524, %v524
    %v607 = vpack.c.bf16 %v527, %v527
    %v608 = vpack.c.bf16 %v529, %v529
    %v609 = vpack.c.bf16 %v532, %v532
    %v610 = vpack.c.bf16 %v534, %v534
    %v611 = vpack.c.bf16 %v537, %v537
    %v612 = vpack.c.bf16 %v539, %v539
    %v613 = vpack.c.bf16 %v542, %v542
    %v614 = vpack.c.bf16 %v544, %v544
    %v615 = vpack.c.bf16 %v547, %v547
    %v616 = vpack.c.bf16 %v549, %v549
    %v617 = vpack.c.bf16 %v552, %v552
    %v618 = vpack.c.bf16 %v554, %v554
    %v619 = vpack.c.bf16 %v557, %v557
    %v620 = vpack.c.bf16 %v559, %v559
    %v621 = vpack.c.bf16 %v562, %v562
    %v622 = vpack.c.bf16 %v564, %v564
    %v623 = vpack.c.bf16 %v567, %v567
    %v624 = vpack.c.bf16 %v569, %v569
    %v625 = vpack.c.bf16 %v572, %v572
    %v626 = vpack.c.bf16 %v574, %v574
    %v627 = vpack.c.bf16 %v577, %v577
    %v628 = vpack.c.bf16 %v579, %v579
    %v637 = vunpack.c.l.b16 %v131
    %v638 = vunpack.c.l.b16 %v132
    %v639 = vunpack.c.l.b16 %v133
    %v640 = vunpack.c.l.b16 %v134
    %v641 = vunpack.c.l.b16 %v135
    %v642 = vunpack.c.l.b16 %v136
    %v643 = vunpack.c.l.b16 %v137
    %v644 = vunpack.c.l.b16 %v138
    %v645 = vpack.c.b16 %v638, %v637
    %v646 = vpack.c.b16 %v640, %v639
    %v647 = vpack.c.b16 %v642, %v641
    %v648 = vpack.c.b16 %v644, %v643
    %v653 = vunpack.c.l.b16 %v581
    %v654 = vunpack.c.l.b16 %v582
    %v655 = vunpack.c.l.b16 %v583
    %v656 = vunpack.c.l.b16 %v584
    %v657 = vpack.c.b16 %v654, %v653
    %v658 = vpack.c.b16 %v656, %v655
    %vm661 = vcmask 261120
    %v663 = vsel %vm661, %v645, 0
    %v666 = vsel %vm661, %v646, 0
    %v669 = vsel %vm661, %v647, 0
    %v672 = vsel %vm661, %v648, 0
    %674 = vmatpush.bf16.msra.mxu0 0
    %675 = vmatpush.bf16.msra.mxu0 0
    %676 = vmatpush.bf16.msra.mxu0 0
    %677 = vmatpush.bf16.msra.mxu0 0
    %678 = vmatpush.bf16.msra.mxu0 0
    %679 = vmatpush.bf16.msra.mxu0 0
    %680 = vmatpush.bf16.msra.mxu0 %v658
    %681 = vmatpush.bf16.msra.mxu0 %v657
    %682 = vmatmul.bf16.gmra.mxu0 %v663
    %v683 = vpop.f32.mrf.mxu0
    %v684 = vadd.f32 0.0, %v683
    %v685 = vpop.f32.mrf.mxu0
    %v686 = vadd.f32 0.0, %v685
    %687 = vmatmul.bf16.gmra.mxu0 %v666
    %v688 = vpop.f32.mrf.mxu0
    %v689 = vadd.f32 0.0, %v688
    %v690 = vpop.f32.mrf.mxu0
    %v691 = vadd.f32 0.0, %v690
    %692 = vmatmul.bf16.gmra.mxu0 %v669
    %v693 = vpop.f32.mrf.mxu0
    %v694 = vadd.f32 0.0, %v693
    %v695 = vpop.f32.mrf.mxu0
    %v696 = vadd.f32 0.0, %v695
    %697 = vmatmul.bf16.gmra.mxu0 %v672
    %v698 = vpop.f32.mrf.mxu0
    %v699 = vadd.f32 0.0, %v698
    %v700 = vpop.f32.mrf.mxu0
    %v701 = vadd.f32 0.0, %v700
    %702 = vdwg.mxu0
    %v707 = vunpack.c.l.b16 %v585
    %v708 = vunpack.c.l.b16 %v586
    %v709 = vunpack.c.l.b16 %v587
    %v710 = vunpack.c.l.b16 %v588
    %v711 = vpack.c.b16 %v708, %v707
    %v712 = vpack.c.b16 %v710, %v709
    %715 = vmatpush.bf16.msra.mxu0 0
    %716 = vmatpush.bf16.msra.mxu0 0
    %717 = vmatpush.bf16.msra.mxu0 0
    %718 = vmatpush.bf16.msra.mxu0 0
    %719 = vmatpush.bf16.msra.mxu0 0
    %720 = vmatpush.bf16.msra.mxu0 0
    %721 = vmatpush.bf16.msra.mxu0 %v712
    %722 = vmatpush.bf16.msra.mxu0 %v711
    %723 = vmatmul.bf16.gmra.mxu0 %v663
    %v724 = vpop.f32.mrf.mxu0
    %v725 = vadd.f32 0.0, %v724
    %v726 = vpop.f32.mrf.mxu0
    %v727 = vadd.f32 0.0, %v726
    %728 = vmatmul.bf16.gmra.mxu0 %v666
    %v729 = vpop.f32.mrf.mxu0
    %v730 = vadd.f32 0.0, %v729
    %v731 = vpop.f32.mrf.mxu0
    %v732 = vadd.f32 0.0, %v731
    %733 = vmatmul.bf16.gmra.mxu0 %v669
    %v734 = vpop.f32.mrf.mxu0
    %v735 = vadd.f32 0.0, %v734
    %v736 = vpop.f32.mrf.mxu0
    %v737 = vadd.f32 0.0, %v736
    %738 = vmatmul.bf16.gmra.mxu0 %v672
    %v739 = vpop.f32.mrf.mxu0
    %v740 = vadd.f32 0.0, %v739
    %v741 = vpop.f32.mrf.mxu0
    %v742 = vadd.f32 0.0, %v741
    %743 = vdwg.mxu0
    %v748 = vunpack.c.l.b16 %v589
    %v749 = vunpack.c.l.b16 %v590
    %v750 = vunpack.c.l.b16 %v591
    %v751 = vunpack.c.l.b16 %v592
    %v752 = vpack.c.b16 %v749, %v748
    %v753 = vpack.c.b16 %v751, %v750
    %756 = vmatpush.bf16.msra.mxu0 0
    %757 = vmatpush.bf16.msra.mxu0 0
    %758 = vmatpush.bf16.msra.mxu0 0
    %759 = vmatpush.bf16.msra.mxu0 0
    %760 = vmatpush.bf16.msra.mxu0 0
    %761 = vmatpush.bf16.msra.mxu0 0
    %762 = vmatpush.bf16.msra.mxu0 %v753
    %763 = vmatpush.bf16.msra.mxu0 %v752
    %764 = vmatmul.bf16.gmra.mxu0 %v663
    %v765 = vpop.f32.mrf.mxu0
    %v766 = vadd.f32 0.0, %v765
    %v767 = vpop.f32.mrf.mxu0
    %v768 = vadd.f32 0.0, %v767
    %769 = vmatmul.bf16.gmra.mxu0 %v666
    %v770 = vpop.f32.mrf.mxu0
    %v771 = vadd.f32 0.0, %v770
    %v772 = vpop.f32.mrf.mxu0
    %v773 = vadd.f32 0.0, %v772
    %774 = vmatmul.bf16.gmra.mxu0 %v669
    %v775 = vpop.f32.mrf.mxu0
    %v776 = vadd.f32 0.0, %v775
    %v777 = vpop.f32.mrf.mxu0
    %v778 = vadd.f32 0.0, %v777
    %779 = vmatmul.bf16.gmra.mxu0 %v672
    %v780 = vpop.f32.mrf.mxu0
    %v781 = vadd.f32 0.0, %v780
    %v782 = vpop.f32.mrf.mxu0
    %v783 = vadd.f32 0.0, %v782
    %784 = vdwg.mxu0
    %v789 = vunpack.c.l.b16 %v593
    %v790 = vunpack.c.l.b16 %v594
    %v791 = vunpack.c.l.b16 %v595
    %v792 = vunpack.c.l.b16 %v596
    %v793 = vpack.c.b16 %v790, %v789
    %v794 = vpack.c.b16 %v792, %v791
    %797 = vmatpush.bf16.msra.mxu0 0
    %798 = vmatpush.bf16.msra.mxu0 0
    %799 = vmatpush.bf16.msra.mxu0 0
    %800 = vmatpush.bf16.msra.mxu0 0
    %801 = vmatpush.bf16.msra.mxu0 0
    %802 = vmatpush.bf16.msra.mxu0 0
    %803 = vmatpush.bf16.msra.mxu0 %v794
    %804 = vmatpush.bf16.msra.mxu0 %v793
    %805 = vmatmul.bf16.gmra.mxu0 %v663
    %v806 = vpop.f32.mrf.mxu0
    %v807 = vadd.f32 0.0, %v806
    %v808 = vpop.f32.mrf.mxu0
    %v809 = vadd.f32 0.0, %v808
    %810 = vmatmul.bf16.gmra.mxu0 %v666
    %v811 = vpop.f32.mrf.mxu0
    %v812 = vadd.f32 0.0, %v811
    %v813 = vpop.f32.mrf.mxu0
    %v814 = vadd.f32 0.0, %v813
    %815 = vmatmul.bf16.gmra.mxu0 %v669
    %v816 = vpop.f32.mrf.mxu0
    %v817 = vadd.f32 0.0, %v816
    %v818 = vpop.f32.mrf.mxu0
    %v819 = vadd.f32 0.0, %v818
    %820 = vmatmul.bf16.gmra.mxu0 %v672
    %v821 = vpop.f32.mrf.mxu0
    %v822 = vadd.f32 0.0, %v821
    %v823 = vpop.f32.mrf.mxu0
    %v824 = vadd.f32 0.0, %v823
    %825 = vdwg.mxu0
    %v830 = vunpack.c.l.b16 %v597
    %v831 = vunpack.c.l.b16 %v598
    %v832 = vunpack.c.l.b16 %v599
    %v833 = vunpack.c.l.b16 %v600
    %v834 = vpack.c.b16 %v831, %v830
    %v835 = vpack.c.b16 %v833, %v832
    %838 = vmatpush.bf16.msra.mxu0 0
    %839 = vmatpush.bf16.msra.mxu0 0
    %840 = vmatpush.bf16.msra.mxu0 0
    %841 = vmatpush.bf16.msra.mxu0 0
    %842 = vmatpush.bf16.msra.mxu0 0
    %843 = vmatpush.bf16.msra.mxu0 0
    %844 = vmatpush.bf16.msra.mxu0 %v835
    %845 = vmatpush.bf16.msra.mxu0 %v834
    %846 = vmatmul.bf16.gmra.mxu0 %v663
    %v847 = vpop.f32.mrf.mxu0
    %v848 = vadd.f32 0.0, %v847
    %v849 = vpop.f32.mrf.mxu0
    %v850 = vadd.f32 0.0, %v849
    %851 = vmatmul.bf16.gmra.mxu0 %v666
    %v852 = vpop.f32.mrf.mxu0
    %v853 = vadd.f32 0.0, %v852
    %v854 = vpop.f32.mrf.mxu0
    %v855 = vadd.f32 0.0, %v854
    %856 = vmatmul.bf16.gmra.mxu0 %v669
    %v857 = vpop.f32.mrf.mxu0
    %v858 = vadd.f32 0.0, %v857
    %v859 = vpop.f32.mrf.mxu0
    %v860 = vadd.f32 0.0, %v859
    %861 = vmatmul.bf16.gmra.mxu0 %v672
    %v862 = vpop.f32.mrf.mxu0
    %v863 = vadd.f32 0.0, %v862
    %v864 = vpop.f32.mrf.mxu0
    %v865 = vadd.f32 0.0, %v864
    %866 = vdwg.mxu0
    %v871 = vunpack.c.l.b16 %v601
    %v872 = vunpack.c.l.b16 %v602
    %v873 = vunpack.c.l.b16 %v603
    %v874 = vunpack.c.l.b16 %v604
    %v875 = vpack.c.b16 %v872, %v871
    %v876 = vpack.c.b16 %v874, %v873
    %879 = vmatpush.bf16.msra.mxu0 0
    %880 = vmatpush.bf16.msra.mxu0 0
    %881 = vmatpush.bf16.msra.mxu0 0
    %882 = vmatpush.bf16.msra.mxu0 0
    %883 = vmatpush.bf16.msra.mxu0 0
    %884 = vmatpush.bf16.msra.mxu0 0
    %885 = vmatpush.bf16.msra.mxu0 %v876
    %886 = vmatpush.bf16.msra.mxu0 %v875
    %887 = vmatmul.bf16.gmra.mxu0 %v663
    %v888 = vpop.f32.mrf.mxu0
    %v889 = vadd.f32 0.0, %v888
    %v890 = vpop.f32.mrf.mxu0
    %v891 = vadd.f32 0.0, %v890
    %892 = vmatmul.bf16.gmra.mxu0 %v666
    %v893 = vpop.f32.mrf.mxu0
    %v894 = vadd.f32 0.0, %v893
    %v895 = vpop.f32.mrf.mxu0
    %v896 = vadd.f32 0.0, %v895
    %897 = vmatmul.bf16.gmra.mxu0 %v669
    %v898 = vpop.f32.mrf.mxu0
    %v899 = vadd.f32 0.0, %v898
    %v900 = vpop.f32.mrf.mxu0
    %v901 = vadd.f32 0.0, %v900
    %902 = vmatmul.bf16.gmra.mxu0 %v672
    %v903 = vpop.f32.mrf.mxu0
    %v904 = vadd.f32 0.0, %v903
    %v905 = vpop.f32.mrf.mxu0
    %v906 = vadd.f32 0.0, %v905
    %907 = vdwg.mxu0
    %v912 = vunpack.c.l.b16 %v605
    %v913 = vunpack.c.l.b16 %v606
    %v914 = vunpack.c.l.b16 %v607
    %v915 = vunpack.c.l.b16 %v608
    %v916 = vpack.c.b16 %v913, %v912
    %v917 = vpack.c.b16 %v915, %v914
    %920 = vmatpush.bf16.msra.mxu0 0
    %921 = vmatpush.bf16.msra.mxu0 0
    %922 = vmatpush.bf16.msra.mxu0 0
    %923 = vmatpush.bf16.msra.mxu0 0
    %924 = vmatpush.bf16.msra.mxu0 0
    %925 = vmatpush.bf16.msra.mxu0 0
    %926 = vmatpush.bf16.msra.mxu0 %v917
    %927 = vmatpush.bf16.msra.mxu0 %v916
    %928 = vmatmul.bf16.gmra.mxu0 %v663
    %v929 = vpop.f32.mrf.mxu0
    %v930 = vadd.f32 0.0, %v929
    %v931 = vpop.f32.mrf.mxu0
    %v932 = vadd.f32 0.0, %v931
    %933 = vmatmul.bf16.gmra.mxu0 %v666
    %v934 = vpop.f32.mrf.mxu0
    %v935 = vadd.f32 0.0, %v934
    %v936 = vpop.f32.mrf.mxu0
    %v937 = vadd.f32 0.0, %v936
    %938 = vmatmul.bf16.gmra.mxu0 %v669
    %v939 = vpop.f32.mrf.mxu0
    %v940 = vadd.f32 0.0, %v939
    %v941 = vpop.f32.mrf.mxu0
    %v942 = vadd.f32 0.0, %v941
    %943 = vmatmul.bf16.gmra.mxu0 %v672
    %v944 = vpop.f32.mrf.mxu0
    %v945 = vadd.f32 0.0, %v944
    %v946 = vpop.f32.mrf.mxu0
    %v947 = vadd.f32 0.0, %v946
    %948 = vdwg.mxu0
    %v953 = vunpack.c.l.b16 %v609
    %v954 = vunpack.c.l.b16 %v610
    %v955 = vunpack.c.l.b16 %v611
    %v956 = vunpack.c.l.b16 %v612
    %v957 = vpack.c.b16 %v954, %v953
    %v958 = vpack.c.b16 %v956, %v955
    %961 = vmatpush.bf16.msra.mxu0 0
    %962 = vmatpush.bf16.msra.mxu0 0
    %963 = vmatpush.bf16.msra.mxu0 0
    %964 = vmatpush.bf16.msra.mxu0 0
    %965 = vmatpush.bf16.msra.mxu0 0
    %966 = vmatpush.bf16.msra.mxu0 0
    %967 = vmatpush.bf16.msra.mxu0 %v958
    %968 = vmatpush.bf16.msra.mxu0 %v957
    %969 = vmatmul.bf16.gmra.mxu0 %v663
    %v970 = vpop.f32.mrf.mxu0
    %v971 = vadd.f32 0.0, %v970
    %v972 = vpop.f32.mrf.mxu0
    %v973 = vadd.f32 0.0, %v972
    %974 = vmatmul.bf16.gmra.mxu0 %v666
    %v975 = vpop.f32.mrf.mxu0
    %v976 = vadd.f32 0.0, %v975
    %v977 = vpop.f32.mrf.mxu0
    %v978 = vadd.f32 0.0, %v977
    %979 = vmatmul.bf16.gmra.mxu0 %v669
    %v980 = vpop.f32.mrf.mxu0
    %v981 = vadd.f32 0.0, %v980
    %v982 = vpop.f32.mrf.mxu0
    %v983 = vadd.f32 0.0, %v982
    %984 = vmatmul.bf16.gmra.mxu0 %v672
    %v985 = vpop.f32.mrf.mxu0
    %v986 = vadd.f32 0.0, %v985
    %v987 = vpop.f32.mrf.mxu0
    %v988 = vadd.f32 0.0, %v987
    %989 = vdwg.mxu0
    %v994 = vunpack.c.l.b16 %v613
    %v995 = vunpack.c.l.b16 %v614
    %v996 = vunpack.c.l.b16 %v615
    %v997 = vunpack.c.l.b16 %v616
    %v998 = vpack.c.b16 %v995, %v994
    %v999 = vpack.c.b16 %v997, %v996
    %1002 = vmatpush.bf16.msra.mxu0 0
    %1003 = vmatpush.bf16.msra.mxu0 0
    %1004 = vmatpush.bf16.msra.mxu0 0
    %1005 = vmatpush.bf16.msra.mxu0 0
    %1006 = vmatpush.bf16.msra.mxu0 0
    %1007 = vmatpush.bf16.msra.mxu0 0
    %1008 = vmatpush.bf16.msra.mxu0 %v999
    %1009 = vmatpush.bf16.msra.mxu0 %v998
    %1010 = vmatmul.bf16.gmra.mxu0 %v663
    %v1011 = vpop.f32.mrf.mxu0
    %v1012 = vadd.f32 0.0, %v1011
    %v1013 = vpop.f32.mrf.mxu0
    %v1014 = vadd.f32 0.0, %v1013
    %1015 = vmatmul.bf16.gmra.mxu0 %v666
    %v1016 = vpop.f32.mrf.mxu0
    %v1017 = vadd.f32 0.0, %v1016
    %v1018 = vpop.f32.mrf.mxu0
    %v1019 = vadd.f32 0.0, %v1018
    %1020 = vmatmul.bf16.gmra.mxu0 %v669
    %v1021 = vpop.f32.mrf.mxu0
    %v1022 = vadd.f32 0.0, %v1021
    %v1023 = vpop.f32.mrf.mxu0
    %v1024 = vadd.f32 0.0, %v1023
    %1025 = vmatmul.bf16.gmra.mxu0 %v672
    %v1026 = vpop.f32.mrf.mxu0
    %v1027 = vadd.f32 0.0, %v1026
    %v1028 = vpop.f32.mrf.mxu0
    %v1029 = vadd.f32 0.0, %v1028
    %1030 = vdwg.mxu0
    %v1035 = vunpack.c.l.b16 %v617
    %v1036 = vunpack.c.l.b16 %v618
    %v1037 = vunpack.c.l.b16 %v619
    %v1038 = vunpack.c.l.b16 %v620
    %v1039 = vpack.c.b16 %v1036, %v1035
    %v1040 = vpack.c.b16 %v1038, %v1037
    %1043 = vmatpush.bf16.msra.mxu0 0
    %1044 = vmatpush.bf16.msra.mxu0 0
    %1045 = vmatpush.bf16.msra.mxu0 0
    %1046 = vmatpush.bf16.msra.mxu0 0
    %1047 = vmatpush.bf16.msra.mxu0 0
    %1048 = vmatpush.bf16.msra.mxu0 0
    %1049 = vmatpush.bf16.msra.mxu0 %v1040
    %1050 = vmatpush.bf16.msra.mxu0 %v1039
    %1051 = vmatmul.bf16.gmra.mxu0 %v663
    %v1052 = vpop.f32.mrf.mxu0
    %v1053 = vadd.f32 0.0, %v1052
    %v1054 = vpop.f32.mrf.mxu0
    %v1055 = vadd.f32 0.0, %v1054
    %1056 = vmatmul.bf16.gmra.mxu0 %v666
    %v1057 = vpop.f32.mrf.mxu0
    %v1058 = vadd.f32 0.0, %v1057
    %v1059 = vpop.f32.mrf.mxu0
    %v1060 = vadd.f32 0.0, %v1059
    %1061 = vmatmul.bf16.gmra.mxu0 %v669
    %v1062 = vpop.f32.mrf.mxu0
    %v1063 = vadd.f32 0.0, %v1062
    %v1064 = vpop.f32.mrf.mxu0
    %v1065 = vadd.f32 0.0, %v1064
    %1066 = vmatmul.bf16.gmra.mxu0 %v672
    %v1067 = vpop.f32.mrf.mxu0
    %v1068 = vadd.f32 0.0, %v1067
    %v1069 = vpop.f32.mrf.mxu0
    %v1070 = vadd.f32 0.0, %v1069
    %1071 = vdwg.mxu0
    %v1076 = vunpack.c.l.b16 %v621
    %v1077 = vunpack.c.l.b16 %v622
    %v1078 = vunpack.c.l.b16 %v623
    %v1079 = vunpack.c.l.b16 %v624
    %v1080 = vpack.c.b16 %v1077, %v1076
    %v1081 = vpack.c.b16 %v1079, %v1078
    %1084 = vmatpush.bf16.msra.mxu0 0
    %1085 = vmatpush.bf16.msra.mxu0 0
    %1086 = vmatpush.bf16.msra.mxu0 0
    %1087 = vmatpush.bf16.msra.mxu0 0
    %1088 = vmatpush.bf16.msra.mxu0 0
    %1089 = vmatpush.bf16.msra.mxu0 0
    %1090 = vmatpush.bf16.msra.mxu0 %v1081
    %1091 = vmatpush.bf16.msra.mxu0 %v1080
    %1092 = vmatmul.bf16.gmra.mxu0 %v663
    %v1093 = vpop.f32.mrf.mxu0
    %v1094 = vadd.f32 0.0, %v1093
    %v1095 = vpop.f32.mrf.mxu0
    %v1096 = vadd.f32 0.0, %v1095
    %1097 = vmatmul.bf16.gmra.mxu0 %v666
    %v1098 = vpop.f32.mrf.mxu0
    %v1099 = vadd.f32 0.0, %v1098
    %v1100 = vpop.f32.mrf.mxu0
    %v1101 = vadd.f32 0.0, %v1100
    %1102 = vmatmul.bf16.gmra.mxu0 %v669
    %v1103 = vpop.f32.mrf.mxu0
    %v1104 = vadd.f32 0.0, %v1103
    %v1105 = vpop.f32.mrf.mxu0
    %v1106 = vadd.f32 0.0, %v1105
    %1107 = vmatmul.bf16.gmra.mxu0 %v672
    %v1108 = vpop.f32.mrf.mxu0
    %v1109 = vadd.f32 0.0, %v1108
    %v1110 = vpop.f32.mrf.mxu0
    %v1111 = vadd.f32 0.0, %v1110
    %1112 = vdwg.mxu0
    %v1117 = vunpack.c.l.b16 %v625
    %v1118 = vunpack.c.l.b16 %v626
    %v1119 = vunpack.c.l.b16 %v627
    %v1120 = vunpack.c.l.b16 %v628
    %v1121 = vpack.c.b16 %v1118, %v1117
    %v1122 = vpack.c.b16 %v1120, %v1119
    %1125 = vmatpush.bf16.msra.mxu0 0
    %1126 = vmatpush.bf16.msra.mxu0 0
    %1127 = vmatpush.bf16.msra.mxu0 0
    %1128 = vmatpush.bf16.msra.mxu0 0
    %1129 = vmatpush.bf16.msra.mxu0 0
    %1130 = vmatpush.bf16.msra.mxu0 0
    %1131 = vmatpush.bf16.msra.mxu0 %v1122
    %1132 = vmatpush.bf16.msra.mxu0 %v1121
    %1133 = vmatmul.bf16.gmra.mxu0 %v663
    %v1134 = vpop.f32.mrf.mxu0
    %v1135 = vadd.f32 0.0, %v1134
    %v1136 = vpop.f32.mrf.mxu0
    %v1137 = vadd.f32 0.0, %v1136
    %1138 = vmatmul.bf16.gmra.mxu0 %v666
    %v1139 = vpop.f32.mrf.mxu0
    %v1140 = vadd.f32 0.0, %v1139
    %v1141 = vpop.f32.mrf.mxu0
    %v1142 = vadd.f32 0.0, %v1141
    %1143 = vmatmul.bf16.gmra.mxu0 %v669
    %v1144 = vpop.f32.mrf.mxu0
    %v1145 = vadd.f32 0.0, %v1144
    %v1146 = vpop.f32.mrf.mxu0
    %v1147 = vadd.f32 0.0, %v1146
    %1148 = vmatmul.bf16.gmra.mxu0 %v672
    %v1149 = vpop.f32.mrf.mxu0
    %v1150 = vadd.f32 0.0, %v1149
    %v1151 = vpop.f32.mrf.mxu0
    %v1152 = vadd.f32 0.0, %v1151
    %1153 = vdwg.mxu0
    %1154 = vst [vmem:[#allocation12] sm:$0xff] %v684
    %1155 = vst [vmem:[#allocation12 + $0x8] sm:$0xff] %v686
    %1156 = vst [vmem:[#allocation12 + $0x10] sm:$0xff] %v689
    %1157 = vst [vmem:[#allocation12 + $0x18] sm:$0xff] %v691
    %1158 = vst [vmem:[#allocation12 + $0x20] sm:$0xff] %v694
    %1159 = vst [vmem:[#allocation12 + $0x28] sm:$0xff] %v696
    %1160 = vst [vmem:[#allocation12 + $0x30] sm:$0xff] %v699
    %1161 = vst [vmem:[#allocation12 + $0x38] sm:$0xff] %v701
    %1162 = vst [vmem:[#allocation12 + $0x40] sm:$0xff] %v725
    %1163 = vst [vmem:[#allocation12 + $0x48] sm:$0xff] %v727
    %1164 = vst [vmem:[#allocation12 + $0x50] sm:$0xff] %v730
    %1165 = vst [vmem:[#allocation12 + $0x58] sm:$0xff] %v732
    %1166 = vst [vmem:[#allocation12 + $0x60] sm:$0xff] %v735
    %1167 = vst [vmem:[#allocation12 + $0x68] sm:$0xff] %v737
    %1168 = vst [vmem:[#allocation12 + $0x70] sm:$0xff] %v740
    %1169 = vst [vmem:[#allocation12 + $0x78] sm:$0xff] %v742
    %1170 = vst [vmem:[#allocation12 + $0x80] sm:$0xff] %v766
    %1171 = vst [vmem:[#allocation12 + $0x88] sm:$0xff] %v768
    %1172 = vst [vmem:[#allocation12 + $0x90] sm:$0xff] %v771
    %1173 = vst [vmem:[#allocation12 + $0x98] sm:$0xff] %v773
    %1174 = vst [vmem:[#allocation12 + $0xa0] sm:$0xff] %v776
    %1175 = vst [vmem:[#allocation12 + $0xa8] sm:$0xff] %v778
    %1176 = vst [vmem:[#allocation12 + $0xb0] sm:$0xff] %v781
    %1177 = vst [vmem:[#allocation12 + $0xb8] sm:$0xff] %v783
    %1178 = vst [vmem:[#allocation12 + $0xc0] sm:$0xff] %v807
    %1179 = vst [vmem:[#allocation12 + $0xc8] sm:$0xff] %v809
    %1180 = vst [vmem:[#allocation12 + $0xd0] sm:$0xff] %v812
    %1181 = vst [vmem:[#allocation12 + $0xd8] sm:$0xff] %v814
    %1182 = vst [vmem:[#allocation12 + $0xe0] sm:$0xff] %v817
    %1183 = vst [vmem:[#allocation12 + $0xe8] sm:$0xff] %v819
    %1184 = vst [vmem:[#allocation12 + $0xf0] sm:$0xff] %v822
    %1185 = vst [vmem:[#allocation12 + $0xf8] sm:$0xff] %v824
    %1186 = vst [vmem:[#allocation12 + $0x100] sm:$0xff] %v848
    %1187 = vst [vmem:[#allocation12 + $0x108] sm:$0xff] %v850
    %1188 = vst [vmem:[#allocation12 + $0x110] sm:$0xff] %v853
    %1189 = vst [vmem:[#allocation12 + $0x118] sm:$0xff] %v855
    %1190 = vst [vmem:[#allocation12 + $0x120] sm:$0xff] %v858
    %1191 = vst [vmem:[#allocation12 + $0x128] sm:$0xff] %v860
    %1192 = vst [vmem:[#allocation12 + $0x130] sm:$0xff] %v863
    %1193 = vst [vmem:[#allocation12 + $0x138] sm:$0xff] %v865
    %1194 = vst [vmem:[#allocation12 + $0x140] sm:$0xff] %v889
    %1195 = vst [vmem:[#allocation12 + $0x148] sm:$0xff] %v891
    %1196 = vst [vmem:[#allocation12 + $0x150] sm:$0xff] %v894
    %1197 = vst [vmem:[#allocation12 + $0x158] sm:$0xff] %v896
    %1198 = vst [vmem:[#allocation12 + $0x160] sm:$0xff] %v899
    %1199 = vst [vmem:[#allocation12 + $0x168] sm:$0xff] %v901
    %1200 = vst [vmem:[#allocation12 + $0x170] sm:$0xff] %v904
    %1201 = vst [vmem:[#allocation12 + $0x178] sm:$0xff] %v906
    %1202 = vst [vmem:[#allocation12 + $0x180] sm:$0xff] %v930
    %1203 = vst [vmem:[#allocation12 + $0x188] sm:$0xff] %v932
    %1204 = vst [vmem:[#allocation12 + $0x190] sm:$0xff] %v935
    %1205 = vst [vmem:[#allocation12 + $0x198] sm:$0xff] %v937
    %1206 = vst [vmem:[#allocation12 + $0x1a0] sm:$0xff] %v940
    %1207 = vst [vmem:[#allocation12 + $0x1a8] sm:$0xff] %v942
    %1208 = vst [vmem:[#allocation12 + $0x1b0] sm:$0xff] %v945
    %1209 = vst [vmem:[#allocation12 + $0x1b8] sm:$0xff] %v947
    %1210 = vst [vmem:[#allocation12 + $0x1c0] sm:$0xff] %v971
    %1211 = vst [vmem:[#allocation12 + $0x1c8] sm:$0xff] %v973
    %1212 = vst [vmem:[#allocation12 + $0x1d0] sm:$0xff] %v976
    %1213 = vst [vmem:[#allocation12 + $0x1d8] sm:$0xff] %v978
    %1214 = vst [vmem:[#allocation12 + $0x1e0] sm:$0xff] %v981
    %1215 = vst [vmem:[#allocation12 + $0x1e8] sm:$0xff] %v983
    %1216 = vst [vmem:[#allocation12 + $0x1f0] sm:$0xff] %v986
    %1217 = vst [vmem:[#allocation12 + $0x1f8] sm:$0xff] %v988
    %1218 = vst [vmem:[#allocation12 + $0x200] sm:$0xff] %v1012
    %1219 = vst [vmem:[#allocation12 + $0x208] sm:$0xff] %v1014
    %1220 = vst [vmem:[#allocation12 + $0x210] sm:$0xff] %v1017
    %1221 = vst [vmem:[#allocation12 + $0x218] sm:$0xff] %v1019
    %1222 = vst [vmem:[#allocation12 + $0x220] sm:$0xff] %v1022
    %1223 = vst [vmem:[#allocation12 + $0x228] sm:$0xff] %v1024
    %1224 = vst [vmem:[#allocation12 + $0x230] sm:$0xff] %v1027
    %1225 = vst [vmem:[#allocation12 + $0x238] sm:$0xff] %v1029
    %1226 = vst [vmem:[#allocation12 + $0x240] sm:$0xff] %v1053
    %1227 = vst [vmem:[#allocation12 + $0x248] sm:$0xff] %v1055
    %1228 = vst [vmem:[#allocation12 + $0x250] sm:$0xff] %v1058
    %1229 = vst [vmem:[#allocation12 + $0x258] sm:$0xff] %v1060
    %1230 = vst [vmem:[#allocation12 + $0x260] sm:$0xff] %v1063
    %1231 = vst [vmem:[#allocation12 + $0x268] sm:$0xff] %v1065
    %1232 = vst [vmem:[#allocation12 + $0x270] sm:$0xff] %v1068
    %1233 = vst [vmem:[#allocation12 + $0x278] sm:$0xff] %v1070
    %1234 = vst [vmem:[#allocation12 + $0x280] sm:$0xff] %v1094
    %1235 = vst [vmem:[#allocation12 + $0x288] sm:$0xff] %v1096
    %1236 = vst [vmem:[#allocation12 + $0x290] sm:$0xff] %v1099
    %1237 = vst [vmem:[#allocation12 + $0x298] sm:$0xff] %v1101
    %1238 = vst [vmem:[#allocation12 + $0x2a0] sm:$0xff] %v1104
    %1239 = vst [vmem:[#allocation12 + $0x2a8] sm:$0xff] %v1106
    %1240 = vst [vmem:[#allocation12 + $0x2b0] sm:$0xff] %v1109
    %1241 = vst [vmem:[#allocation12 + $0x2b8] sm:$0xff] %v1111
    %1242 = vst [vmem:[#allocation12 + $0x2c0] sm:$0xff] %v1135
    %1243 = vst [vmem:[#allocation12 + $0x2c8] sm:$0xff] %v1137
    %1244 = vst [vmem:[#allocation12 + $0x2d0] sm:$0xff] %v1140
    %1245 = vst [vmem:[#allocation12 + $0x2d8] sm:$0xff] %v1142
    %1246 = vst [vmem:[#allocation12 + $0x2e0] sm:$0xff] %v1145
    %1247 = vst [vmem:[#allocation12 + $0x2e8] sm:$0xff] %v1147
    %1248 = vst [vmem:[#allocation12 + $0x2f0] sm:$0xff] %v1150
    %1249 = vst [vmem:[#allocation12 + $0x2f8] sm:$0xff] %v1152
    // Predicated region
    $region42: #{tpu_custom_call.1} parent=1 // pred_check
      _
    $region43: #{tpu_custom_call.1} parent=1 // pred_check_branch
      %1251 = sbr.rel (0) target = $region45
    $region44: #{tpu_custom_call.1} parent=1 // pred_region
      %1253 = vsyncadd [#allocation6], 0
      %s1254 = sshll.u32 [#allocation12], 4
      %s1255 = int_to_ptr.vmem [resolvable:$true] %s1254
      %s1256 = sshll.u32 %s7, 4
      %s1257 = int_to_ptr.hbm [resolvable:$true] %s1256
      %1262 = dma.vmem_to_hbm [thread:$0]  %s1255, 12288, %s1257, [#allocation6], 128, 128, 8
    $region45: #{tpu_custom_call.1} parent=1 // pred_fallthru
      _
    // Predicated region
    $region46: #{tpu_custom_call.1} parent=1 // pred_check
      _
    $region47: #{tpu_custom_call.1} parent=1 // pred_check_branch
      %1264 = sbr.rel (0) target = $region49
    $region48: #{tpu_custom_call.1} parent=1 // pred_region
      %1266 = dma.done [#allocation6], 12288
    $region49: #{tpu_custom_call.1} parent=1 // pred_fallthru
      _
    %1267 = vsyncpa [#allocation5], 1
    %1268 = vsyncpa [#allocation8], 1
    %1269 = vsyncpa [#allocation11], 1
    %1270 = vsyncpa [#allocation6], 1

</llo_original>
